<compile_context>
chip_gen: v5e
topology: v5e:2x2
jax: 0.10.0
libtpu: 0.0.40
codegen_flags: <defaults>
</compile_context>

<pallas_src>
import functools
import math

import jax
import jax.numpy as jnp
from jax.experimental import pallas as pl
from jax.experimental.pallas import tpu as pltpu


# ----------------------------------------------------------------------------
# Kernel 1: fused (x + pos) -> Q, K, V projection, emitted head-major.
# ----------------------------------------------------------------------------
def _qkv_proj_kernel(x_ref, pos_ref, wqkv_ref, q_ref, k_ref, v_ref,
                     *, num_heads, head_dim, compute_dtype):
    # x_ref    : (1, tp, d_in)
    # pos_ref  : (1, tp, d_in)
    # wqkv_ref : (d_in, 3*d_out)  bf16  [Wq^T | Wk^T | Wv^T]
    # q/k/v_ref: (1, H, tp, hd)   bf16 outputs (head-major)
    d_out = num_heads * head_dim
    tp = x_ref.shape[1]
    scale = 1.0 / math.sqrt(head_dim)

    xp = (x_ref[0] + pos_ref[0]).astype(compute_dtype)               # (tp, d_in)
    qkv = jnp.dot(xp, wqkv_ref[...],
                  preferred_element_type=jnp.float32)                # (tp, 3*d_out)

    def to_heads(mat):                                               # (tp, d_out) -> (H, tp, hd)
        return jnp.transpose(mat.reshape(tp, num_heads, head_dim), (1, 0, 2))

    q_ref[0] = to_heads((qkv[:, :d_out] * scale).astype(compute_dtype))
    k_ref[0] = to_heads(qkv[:, d_out:2 * d_out].astype(compute_dtype))
    v_ref[0] = to_heads(qkv[:, 2 * d_out:].astype(compute_dtype))


# ----------------------------------------------------------------------------
# Kernel 2: flash attention (online softmax) + output projection.
# ----------------------------------------------------------------------------
def _flash_kernel(q_ref, k_ref, v_ref, wo_ref, bo_ref, o_ref,
                  m_s, l_s, acc_s,
                  *, t, num_heads, head_dim, compute_dtype):
    # q_ref  : (1, H, tq, hd)  bf16, pre-scaled by 1/sqrt(hd)
    # k_ref  : (1, H, tk, hd)  bf16
    # v_ref  : (1, H, tk, hd)  bf16
    # wo_ref : (d_out, d_out)  bf16 (transposed)
    # bo_ref : (1, d_out)      f32
    # o_ref  : (1, tq, d_out)
    # m_s/l_s: (H, tq, 1) f32, acc_s: (H, tq, hd) f32  (online-softmax state)
    d_out = num_heads * head_dim
    qi = pl.program_id(1)
    ki = pl.program_id(2)
    num_kv = pl.num_programs(2)

    @pl.when(ki == 0)
    def _init():
        m_s[...] = jnp.full_like(m_s, -jnp.inf)
        l_s[...] = jnp.zeros_like(l_s)
        acc_s[...] = jnp.zeros_like(acc_s)

    def _attn_step(apply_mask):
        q = q_ref[0]                                                 # (H, tq, hd)
        k = k_ref[0]                                                 # (H, tk, hd)
        v = v_ref[0]                                                 # (H, tk, hd)
        s = jnp.einsum("hqd,hkd->hqk", q, k,
                       preferred_element_type=jnp.float32)           # (H, tq, tk)
        if apply_mask:
            # Diagonal tile only (q0 == k0): the causal mask reduces to the
            # static local upper triangle.  -1e30 (finite) => no NaNs.
            row = jax.lax.broadcasted_iota(jnp.int32, (t, t), 0)
            col = jax.lax.broadcasted_iota(jnp.int32, (t, t), 1)
            s = s + jnp.where(col > row, -1e30, 0.0)[None, :, :]

        m_prev = m_s[...]
        m_new = jnp.maximum(m_prev, jnp.max(s, axis=-1, keepdims=True))
        alpha = jnp.exp(m_prev - m_new)                              # (H, tq, 1)
        p = jnp.exp(s - m_new)                                       # (H, tq, tk)
        l_s[...] = alpha * l_s[...] + jnp.sum(p, axis=-1, keepdims=True)
        acc_s[...] = alpha * acc_s[...] + jnp.einsum(
            "hqk,hkd->hqd", p.astype(compute_dtype), v,
            preferred_element_type=jnp.float32)
        m_s[...] = m_new

    # tq == tk, so:  ki <  qi -> fully visible tile (no mask work at all)
    #                ki == qi -> diagonal tile (constant local mask)
    #                ki >  qi -> above the diagonal: compute skipped here and
    #                            the K/V index maps clamp to qi, so no DMA.
    @pl.when(ki < qi)
    def _full_tile():
        _attn_step(False)

    @pl.when(ki == qi)
    def _diag_tile():
        _attn_step(True)

    # TODO(synk): dropout on the attention weights is identity here (eval /
    # p=0.0); training-mode dropout would use pltpu.prng_seed + prng_random_bits.

    @pl.when(ki == num_kv - 1)
    def _finalize():
        ctx = acc_s[...] * pl.reciprocal(l_s[...], approx=True)      # (H, tq, hd)
        ctx = jnp.transpose(ctx, (1, 0, 2)).reshape(t, d_out)        # (tq, d_out)
        out = jnp.dot(ctx.astype(compute_dtype), wo_ref[...],
                      preferred_element_type=jnp.float32) + bo_ref[...]
        o_ref[0] = out.astype(o_ref.dtype)


# ----------------------------------------------------------------------------
# VMEM sizing helpers (generation-aware: stay inside v7x's 64 MiB VMEM).
# ----------------------------------------------------------------------------
def _flash_vmem_bytes(t, num_heads, head_dim, d_out, out_itemsize):
    bf16 = 2
    qkv_blocks = 3 * 2 * num_heads * t * head_dim * bf16     # q/k/v, double-buffered
    weights = d_out * d_out * bf16 + d_out * 4                # Wo + bias, single-buffered
    out_block = 2 * t * d_out * out_itemsize                  # output, double-buffered
    scratch = 2 * num_heads * t * 4 + num_heads * t * head_dim * 4
    transients = 3 * num_heads * t * t * 4                    # s, p (+ temps), f32
    return qkv_blocks + weights + out_block + scratch + transients


def _proj_vmem_bytes(t, d_in, d_out, num_heads, head_dim, in_itemsize):
    bf16 = 2
    x_blocks = 2 * 2 * t * d_in * in_itemsize                 # x + pos, double-buffered
    weights = d_in * 3 * d_out * bf16                         # fused W, single-buffered
    out_blocks = 3 * 2 * num_heads * t * head_dim * bf16      # q/k/v outputs
    transients = 2 * t * 3 * d_out * 4                        # xp + qkv, f32
    return x_blocks + weights + out_blocks + transients


def _vmem_limit_bytes(estimate):
    # Generous headroom, but never above v7x's 64 MiB physical VMEM.
    return int(min(max(2 * estimate, 16 * 1024 * 1024), 64 * 1024 * 1024))


def _pick_tile(T, num_heads, head_dim, d_out, out_itemsize,
               budget=40 * 1024 * 1024):
    # 256 keeps the 256x256 MXU on v6e/v7x well fed for p@V while the softmax
    # transients stay inside v7x's VMEM; fall back to 128, then to one tile.
    for t in (256, 128):
        if T % t == 0 and _flash_vmem_bytes(
                t, num_heads, head_dim, d_out, out_itemsize) <= budget:
            return t
    return T


# ----------------------------------------------------------------------------
# Wrapper.
# ----------------------------------------------------------------------------
def multi_head_attention(x, pos_emb, wq_t, wk_t, wv_t, wo_t, bo, *,
                         num_heads, compute_dtype=jnp.bfloat16):
    """x: (B, T, d_in) -> (B, T, d_out).  Weights pre-transposed to (in, out)."""
    B, T, d_in = x.shape
    d_out = wq_t.shape[1]
    assert d_out % num_heads == 0, "d_out must be divisible by num_heads"
    assert pos_emb.shape[1] >= T, "sequence longer than context_length"
    head_dim = d_out // num_heads
    out_itemsize = x.dtype.itemsize

    # Single tile size for both Q and KV so the only masked tile is ki == qi.
    t = _pick_tile(T, num_heads, head_dim, d_out, out_itemsize)
    num_t = T // t

    pos = pos_emb[:, :T, :].astype(x.dtype)
    wqkv = jnp.concatenate([wq_t, wk_t, wv_t], axis=1).astype(compute_dtype)
    wo = wo_t.astype(compute_dtype)
    bo2d = bo.reshape(1, d_out).astype(jnp.float32)

    # ------------------ stage 1: fused QKV projection ------------------
    proj_kernel = functools.partial(_qkv_proj_kernel, num_heads=num_heads,
                                    head_dim=head_dim,
                                    compute_dtype=compute_dtype)
    qkv_shape = jax.ShapeDtypeStruct((B, num_heads, T, head_dim), compute_dtype)
    proj_cost = pl.CostEstimate(
        flops=int(2 * B * T * d_in * 3 * d_out),
        transcendentals=0,
        bytes_accessed=int(x.size * x.dtype.itemsize
                           + pos.size * pos.dtype.itemsize
                           + wqkv.size * 2
                           + 3 * B * num_heads * T * head_dim * 2))
    q_hm, k_hm, v_hm = pl.pallas_call(
        proj_kernel,
        out_shape=(qkv_shape, qkv_shape, qkv_shape),
        grid_spec=pltpu.PrefetchScalarGridSpec(
            num_scalar_prefetch=0,
            grid=(B, num_t),
            in_specs=[
                pl.BlockSpec((1, t, d_in), lambda b, ti: (b, ti, 0)),     # x
                pl.BlockSpec((1, t, d_in), lambda b, ti: (0, ti, 0)),     # pos
                pl.BlockSpec((d_in, 3 * d_out), lambda b, ti: (0, 0),
                             pipeline_mode=pl.Buffered(1)),               # fused W
            ],
            out_specs=(
                pl.BlockSpec((1, num_heads, t, head_dim),
                             lambda b, ti: (b, 0, ti, 0)),
                pl.BlockSpec((1, num_heads, t, head_dim),
                             lambda b, ti: (b, 0, ti, 0)),
                pl.BlockSpec((1, num_heads, t, head_dim),
                             lambda b, ti: (b, 0, ti, 0)),
            )),
        compiler_params=pltpu.CompilerParams(
            dimension_semantics=("parallel", "parallel"),
            vmem_limit_bytes=_vmem_limit_bytes(
                _proj_vmem_bytes(t, d_in, d_out, num_heads, head_dim,
                                 x.dtype.itemsize))),
        cost_estimate=proj_cost,
    )(x, pos, wqkv)

    # ------------------ stage 2: flash attention + out_proj ------------------
    flash_kernel = functools.partial(_flash_kernel, t=t, num_heads=num_heads,
                                     head_dim=head_dim,
                                     compute_dtype=compute_dtype)
    avg_kv_reads = (num_t + 1) / 2.0   # causal: K/V tile ki is read (num_t - ki) times
    flash_cost = pl.CostEstimate(
        flops=int(2 * B * num_heads * T * T * head_dim     # QK^T + PV (causal ~T^2/2 each)
                  + 2 * B * T * d_out * d_out),            # out projection
        transcendentals=int(B * num_heads * T * T // 2),
        bytes_accessed=int(B * num_heads * T * head_dim * 2
                           + 2 * B * num_heads * T * head_dim * 2 * avg_kv_reads
                           + wo.size * 2 + bo2d.size * 4
                           + B * T * d_out * out_itemsize))

    grid_spec = pltpu.PrefetchScalarGridSpec(
        num_scalar_prefetch=0,
        grid=(B, num_t, num_t),
        in_specs=[
            pl.BlockSpec((1, num_heads, t, head_dim),
                         lambda b, qi, ki: (b, 0, qi, 0)),                     # Q
            pl.BlockSpec((1, num_heads, t, head_dim),
                         lambda b, qi, ki: (b, 0, jnp.minimum(ki, qi), 0)),    # K (clamped)
            pl.BlockSpec((1, num_heads, t, head_dim),
                         lambda b, qi, ki: (b, 0, jnp.minimum(ki, qi), 0)),    # V (clamped)
            pl.BlockSpec((d_out, d_out), lambda b, qi, ki: (0, 0),
                         pipeline_mode=pl.Buffered(1)),                        # Wo^T
            pl.BlockSpec((1, d_out), lambda b, qi, ki: (0, 0),
                         pipeline_mode=pl.Buffered(1)),                        # bias
        ],
        out_specs=pl.BlockSpec((1, t, d_out), lambda b, qi, ki: (b, qi, 0)),
        scratch_shapes=[
            pltpu.VMEM((num_heads, t, 1), jnp.float32),            # m
            pltpu.VMEM((num_heads, t, 1), jnp.float32),            # l
            pltpu.VMEM((num_heads, t, head_dim), jnp.float32),     # acc
        ],
    )

    return pl.pallas_call(
        flash_kernel,
        out_shape=jax.ShapeDtypeStruct((B, T, d_out), x.dtype),
        grid_spec=grid_spec,
        compiler_params=pltpu.CompilerParams(
            dimension_semantics=("parallel", "parallel", "arbitrary"),
            vmem_limit_bytes=_vmem_limit_bytes(
                _flash_vmem_bytes(t, num_heads, head_dim, d_out, out_itemsize))),
        cost_estimate=flash_cost,
    )(q_hm, k_hm, v_hm, wo, bo2d)


# ----------------------------------------------------------------------------
# Pure-JAX reference (mirrors the PyTorch forward).
# ----------------------------------------------------------------------------
def _reference(x, pos_emb, wq_t, wk_t, wv_t, wo_t, bo, num_heads):
    B, T, d_in = x.shape
    d_out = wq_t.shape[1]
    hd = d_out // num_heads
    xp = x + pos_emb[:, :T, :]
    q = (xp @ wq_t).reshape(B, T, num_heads, hd).transpose(0, 2, 1, 3)
    k = (xp @ wk_t).reshape(B, T, num_heads, hd).transpose(0, 2, 1, 3)
    v = (xp @ wv_t).reshape(B, T, num_heads, hd).transpose(0, 2, 1, 3)
    s = jnp.einsum("bhqd,bhkd->bhqk", q, k) / (hd ** 0.5)
    mask = jnp.triu(jnp.ones((T, T), dtype=bool), k=1)
    s = jnp.where(mask[None, None], -jnp.inf, s)
    w = jax.nn.softmax(s, axis=-1)
    ctx = jnp.einsum("bhqk,bhkd->bhqd", w, v).transpose(0, 2, 1, 3).reshape(B, T, d_out)
    return ctx @ wo_t + bo


if __name__ == "__main__":
    # Small shapes consistent with the module's forward.
    B, T, d_in = 2, 8, 8
    d_out, num_heads = 8, 2
    context_length = 16
    dropout = 0.0  # eval-equivalent; see TODO in kernel

    key = jax.random.PRNGKey(0)
    kx, kp, kq, kk, kv, ko, kb = jax.random.split(key, 7)

    x = jax.random.normal(kx, (B, T, d_in), dtype=jnp.float32)
    pos_emb = jax.random.normal(kp, (1, context_length, d_in), dtype=jnp.float32)
    # nn.Linear weights are (out, in); we store the transposes (in, out).
    wq_t = jax.random.normal(kq, (d_in, d_out), dtype=jnp.float32) * 0.1
    wk_t = jax.random.normal(kk, (d_in, d_out), dtype=jnp.float32) * 0.1
    wv_t = jax.random.normal(kv, (d_in, d_out), dtype=jnp.float32) * 0.1
    wo_t = jax.random.normal(ko, (d_out, d_out), dtype=jnp.float32) * 0.1
    bo = jax.random.normal(kb, (d_out,), dtype=jnp.float32) * 0.1

    out = multi_head_attention(x, pos_emb, wq_t, wk_t, wv_t, wo_t, bo,
                               num_heads=num_heads)
    out = jax.block_until_ready(out)

    ref = _reference(x, pos_emb, wq_t, wk_t, wv_t, wo_t, bo, num_heads)
    assert out.shape == (B, T, d_out)
    # bf16 matmul inputs with f32 accumulation => loose tolerance vs f32 reference.
    assert jnp.allclose(out, ref, atol=2e-2, rtol=2e-2), "mismatch vs reference"

    print("KERNEL_OK")
</pallas_src>

<mosaic_0001>
module attributes {stable_mosaic.version = 11 : i64} {
  func.func @_qkv_proj_kernel(%arg0: i32, %arg1: i32, %arg2: memref<1x8x8xf32, #tpu.memory_space<vmem>>, %arg3: memref<1x8x8xf32, #tpu.memory_space<vmem>>, %arg4: memref<8x24xbf16, #tpu.memory_space<vmem>>, %arg5: memref<1x2x8x4xbf16, #tpu.memory_space<vmem>>, %arg6: memref<1x2x8x4xbf16, #tpu.memory_space<vmem>>, %arg7: memref<1x2x8x4xbf16, #tpu.memory_space<vmem>>) attributes {dimension_semantics = [#tpu.dimension_semantics<parallel>, #tpu.dimension_semantics<parallel>], iteration_bounds = array<i64: 2, 1>, scalar_prefetch = 0 : i64, scratch_operands = 0 : i64, tpu.core_type = #tpu.core_type<tc>, window_params = [{transform_indices = @transform_0, window_bounds = array<i64: 1, 8, 8>}, {transform_indices = @transform_1, window_bounds = array<i64: 1, 8, 8>}, {pipeline_mode = #tpu.pipeline_mode<synchronous>, transform_indices = @transform_2, window_bounds = array<i64: 8, 24>}, {transform_indices = @transform_3, window_bounds = array<i64: 1, 2, 8, 4>}, {transform_indices = @transform_4, window_bounds = array<i64: 1, 2, 8, 4>}, {transform_indices = @transform_5, window_bounds = array<i64: 1, 2, 8, 4>}]} {
    %c0 = arith.constant 0 : index
    %c0_0 = arith.constant 0 : index
    %c0_1 = arith.constant 0 : index
    %0 = vector.load %arg2[%c0, %c0_0, %c0_1] : memref<1x8x8xf32, #tpu.memory_space<vmem>>, vector<1x8x8xf32>
    %1 = vector.shape_cast %0 : vector<1x8x8xf32> to vector<8x8xf32>
    %c0_2 = arith.constant 0 : index
    %c0_3 = arith.constant 0 : index
    %c0_4 = arith.constant 0 : index
    %2 = vector.load %arg3[%c0_2, %c0_3, %c0_4] : memref<1x8x8xf32, #tpu.memory_space<vmem>>, vector<1x8x8xf32>
    %3 = vector.shape_cast %2 : vector<1x8x8xf32> to vector<8x8xf32>
    %4 = arith.addf %1, %3 : vector<8x8xf32>
    %5 = arith.truncf %4 : vector<8x8xf32> to vector<8x8xbf16>
    %c0_5 = arith.constant 0 : index
    %c0_6 = arith.constant 0 : index
    %6 = vector.load %arg4[%c0_5, %c0_6] : memref<8x24xbf16, #tpu.memory_space<vmem>>, vector<8x24xbf16>
    %cst = arith.constant dense<0.000000e+00> : vector<8x24xf32>
    %7 = tpu.matmul %5, %6, %cst {dimension_numbers = #tpu.dot_dimension_numbers<[1], [0], [0], [1], [0, 0, 1, 1], [], []>} : vector<8x8xbf16>, vector<8x24xbf16>, vector<8x24xf32> -> vector<8x24xf32>
    %8 = vector.extract_strided_slice %7 {offsets = [0, 0], sizes = [8, 8], strides = [1, 1]} : vector<8x24xf32> to vector<8x8xf32>
    %cst_7 = arith.constant 5.000000e-01 : f32
    %9 = vector.broadcast %cst_7 : f32 to vector<8x8xf32>
    %10 = arith.mulf %8, %9 : vector<8x8xf32>
    %11 = arith.truncf %10 : vector<8x8xf32> to vector<8x8xbf16>
    %12 = vector.shape_cast %11 : vector<8x8xbf16> to vector<8x2x4xbf16>
    %13 = tpu.transpose %12, [1, 0, 2] : vector<8x2x4xbf16> -> vector<2x8x4xbf16>
    %c0_8 = arith.constant 0 : index
    %c0_9 = arith.constant 0 : index
    %c0_10 = arith.constant 0 : index
    %c0_11 = arith.constant 0 : index
    %14 = vector.load %arg5[%c0_8, %c0_9, %c0_10, %c0_11] : memref<1x2x8x4xbf16, #tpu.memory_space<vmem>>, vector<1x2x8x4xbf16>
    %15 = vector.shape_cast %14 : vector<1x2x8x4xbf16> to vector<2x8x4xbf16>
    %16 = vector.shape_cast %13 : vector<2x8x4xbf16> to vector<1x2x8x4xbf16>
    tpu.vector_store %arg5[%c0_8, %c0_9, %c0_10, %c0_11], %16 {strides = array<i32>} : memref<1x2x8x4xbf16, #tpu.memory_space<vmem>>, vector<1x2x8x4xbf16>,
    %17 = vector.extract_strided_slice %7 {offsets = [0, 8], sizes = [8, 8], strides = [1, 1]} : vector<8x24xf32> to vector<8x8xf32>
    %18 = arith.truncf %17 : vector<8x8xf32> to vector<8x8xbf16>
    %19 = vector.shape_cast %18 : vector<8x8xbf16> to vector<8x2x4xbf16>
    %20 = tpu.transpose %19, [1, 0, 2] : vector<8x2x4xbf16> -> vector<2x8x4xbf16>
    %c0_12 = arith.constant 0 : index
    %c0_13 = arith.constant 0 : index
    %c0_14 = arith.constant 0 : index
    %c0_15 = arith.constant 0 : index
    %21 = vector.load %arg6[%c0_12, %c0_13, %c0_14, %c0_15] : memref<1x2x8x4xbf16, #tpu.memory_space<vmem>>, vector<1x2x8x4xbf16>
    %22 = vector.shape_cast %21 : vector<1x2x8x4xbf16> to vector<2x8x4xbf16>
    %23 = vector.shape_cast %20 : vector<2x8x4xbf16> to vector<1x2x8x4xbf16>
    tpu.vector_store %arg6[%c0_12, %c0_13, %c0_14, %c0_15], %23 {strides = array<i32>} : memref<1x2x8x4xbf16, #tpu.memory_space<vmem>>, vector<1x2x8x4xbf16>,
    %24 = vector.extract_strided_slice %7 {offsets = [0, 16], sizes = [8, 8], strides = [1, 1]} : vector<8x24xf32> to vector<8x8xf32>
    %25 = arith.truncf %24 : vector<8x8xf32> to vector<8x8xbf16>
    %26 = vector.shape_cast %25 : vector<8x8xbf16> to vector<8x2x4xbf16>
    %27 = tpu.transpose %26, [1, 0, 2] : vector<8x2x4xbf16> -> vector<2x8x4xbf16>
    %c0_16 = arith.constant 0 : index
    %c0_17 = arith.constant 0 : index
    %c0_18 = arith.constant 0 : index
    %c0_19 = arith.constant 0 : index
    %28 = vector.load %arg7[%c0_16, %c0_17, %c0_18, %c0_19] : memref<1x2x8x4xbf16, #tpu.memory_space<vmem>>, vector<1x2x8x4xbf16>
    %29 = vector.shape_cast %28 : vector<1x2x8x4xbf16> to vector<2x8x4xbf16>
    %30 = vector.shape_cast %27 : vector<2x8x4xbf16> to vector<1x2x8x4xbf16>
    tpu.vector_store %arg7[%c0_16, %c0_17, %c0_18, %c0_19], %30 {strides = array<i32>} : memref<1x2x8x4xbf16, #tpu.memory_space<vmem>>, vector<1x2x8x4xbf16>,
    return
  }
  func.func @transform_0(%arg0: i32, %arg1: i32) -> (i32, i32, i32) {
    %c0_i32 = arith.constant 0 : i32
    %c0_i32_0 = arith.constant 0 : i32
    return %arg0, %arg1, %c0_i32 : i32, i32, i32
  }
  func.func @transform_1(%arg0: i32, %arg1: i32) -> (i32, i32, i32) {
    %c0_i32 = arith.constant 0 : i32
    %c0_i32_0 = arith.constant 0 : i32
    %c0_i32_1 = arith.constant 0 : i32
    return %c0_i32, %arg1, %c0_i32_0 : i32, i32, i32
  }
  func.func @transform_2(%arg0: i32, %arg1: i32) -> (i32, i32) {
    %c0_i32 = arith.constant 0 : i32
    %c0_i32_0 = arith.constant 0 : i32
    %c0_i32_1 = arith.constant 0 : i32
    return %c0_i32, %c0_i32_0 : i32, i32
  }
  func.func @transform_3(%arg0: i32, %arg1: i32) -> (i32, i32, i32, i32) {
    %c0_i32 = arith.constant 0 : i32
    %c0_i32_0 = arith.constant 0 : i32
    %c0_i32_1 = arith.constant 0 : i32
    return %arg0, %c0_i32, %arg1, %c0_i32_0 : i32, i32, i32, i32
  }
  func.func @transform_4(%arg0: i32, %arg1: i32) -> (i32, i32, i32, i32) {
    %c0_i32 = arith.constant 0 : i32
    %c0_i32_0 = arith.constant 0 : i32
    %c0_i32_1 = arith.constant 0 : i32
    return %arg0, %c0_i32, %arg1, %c0_i32_0 : i32, i32, i32, i32
  }
  func.func @transform_5(%arg0: i32, %arg1: i32) -> (i32, i32, i32, i32) {
    %c0_i32 = arith.constant 0 : i32
    %c0_i32_0 = arith.constant 0 : i32
    %c0_i32_1 = arith.constant 0 : i32
    return %arg0, %c0_i32, %arg1, %c0_i32_0 : i32, i32, i32, i32
  }
}

</mosaic_0001>

<llo_original>
// kernel: tpu_custom_call.1
$region0: #{tpu_custom_call.1}
  #allocation0 [shape = 'u32[]', space=smem, size = 0x4, offset = 0x4, fixed_abs, tag = 'smem constant byte address 0x4 - core index']
  #allocation1 [shape = 'u32[72,128]{1,0:T(1,128)}', space=vmem, size = 0x9000, scoped, tag = 'internal scratch']
  %s0 = inlined_call_operand.hbm [shape: f32[2,8,8], index: 0, kind: input, shape index: {}]
  %s1 = inlined_call_operand.hbm [shape: f32[1,8,8], index: 1, kind: input, shape index: {}]
  %s2 = inlined_call_operand.hbm [shape: bf16[8,24], index: 2, kind: input, shape index: {}]
  %s3 = inlined_call_operand.vmem [shape: bf16[2,2,8,4], index: 3, kind: output, shape index: {0}]
  %s4 = inlined_call_operand.vmem [shape: bf16[2,2,8,4], index: 4, kind: output, shape index: {1}]
  %s5 = inlined_call_operand.vmem [shape: bf16[2,2,8,4], index: 5, kind: output, shape index: {2}]
  %6 = xla_tuple %s3, %s4, %s5
  %s7 = sld [smem:[#allocation0]]
  $region73: #{tpu_custom_call.1} parent=0
    _
  %s9 = ssub.s32 1, %s7
  %s10 = scalar_select 0, %s9, %s7
  $region1: #{tpu_custom_call.1} parent=0
    #allocation2 [shape = 'u8[8192]{0}', space=vmem, size = 0x2000, scoped, tag = 'input window, operand 0']
    #allocation3 [shape = 's32[2]{0}', space=sflag, size = 0x8, scoped, tag = 'scoped memory for tpu_custom_call.1']
    #allocation4 [shape = 'u8[4096]{0}', space=vmem, size = 0x1000, scoped, tag = 'input window, operand 1, single buffered']
    #allocation5 [shape = 's32[1]{0}', space=sflag, size = 0x4, scoped, tag = 'scoped memory for tpu_custom_call.1']
    #allocation6 [shape = 'u8[2048]{0}', space=vmem, size = 0x800, scoped, tag = 'input window, operand 2, single buffered']
    %11 = vsyncpa [#allocation3], 0
    %s12 = scalar_lea.sflag [#allocation3], 1
    %13 = vsyncpa %s12, 0
    %14 = vsyncpa [#allocation5], 0
    loop: start=0, step=1, limit=4
    $region2: #{tpu_custom_call.1} parent=1 // loop_pre_header
      _
    $region3: #{tpu_custom_call.1} parent=1 // loop_header
      %s16 = sphi 0, %s20
      %p17 = scmp.ge.s32.totalorder %s16, 4
      %s23 = sphi 0, %s35
      %s24 = sphi 0, %s31
      %s25 = sphi 0, %s23
      %s26 = sphi 0, %s24
      %s27 = sphi 0, %s25
      %s28 = sphi 0, %s26
      %s40 = sphi 0, %s42
      %s43 = sphi 0, %s40
      %s44 = sphi 0, %s43
      %s60 = sphi 0, %s44
      %s66 = sphi 0, %s68
      %s69 = sphi 0, %s66
      %s70 = sphi 0, %s69
      %s86 = sphi 0, %s70
      %s90 = sphi 0, %s90
      %s92 = sphi 0, %s90
      %s93 = sphi 0, %s92
      %s107 = sphi 0, %s93
      %s115 = sphi 0, %s117
      %s118 = sphi 0, %s115
      %s119 = sphi 0, %s118
      %s135 = sphi 0, %s119
      %s143 = sphi 0, %s145
      %s146 = sphi 0, %s143
      %s147 = sphi 0, %s146
      %s163 = sphi 0, %s147
      %s171 = sphi 0, %s173
      %s174 = sphi 0, %s171
      %s175 = sphi 0, %s174
      %s191 = sphi 0, %s175
    $region4: #{tpu_custom_call.1} parent=1 // loop_header_branch
      %19 = sbr.rel (%p17) target = $region8
    $region5: #{tpu_custom_call.1} parent=1 // loop_body
      %s21 = ssub.s32 %s16, 1
      %s22 = ssub.s32 %s16, 2
      %s29 = sadd.s32 1, %s24
      %p30 = scmp.ge.s32.totalorder %s29, 1
      %s31 = scalar_select %p30, 0, %s29
      %s32 = sadd.s32 1, %s23
      %s33 = scalar_select %p30, %s32, %s23
      %p34 = scmp.ge.s32.totalorder %s33, 2
      %s35 = scalar_select %p34, 0, %s33
      %s36 = ssub.s32 %s23, %s35
      %s37 = ssub.s32 %s24, %s31
      %s38 = sor.u32 %s36, %s37
      %p39 = scmp.eq.s32.totalorder %s38, 0
      %s41 = sadd.s32 %s40, 1
      %s42 = scalar_select %p39, %s40, %s41
      %p45 = pneg %p39
      %p46 = scmp.eq.s32.totalorder %s16, 1
      %p47 = por %p45, %p46
      %p48 = scmp.ne.s32.totalorder %s40, %s43
      %p49 = scmp.eq.s32.totalorder %s16, 0
      %p50 = por %p48, %p49
      %p51 = scmp.ne.s32.totalorder %s40, %s43
      %p52 = scmp.eq.s32.totalorder %s21, 1
      %p53 = por %p51, %p52
      %p54 = scmp.ne.s32.totalorder %s43, %s44
      %p55 = scmp.eq.s32.totalorder %s21, 0
      %p56 = por %p54, %p55
      %p57 = scmp.ne.s32.totalorder %s43, %s44
      %p58 = scmp.eq.s32.totalorder %s22, 1
      %p59 = por %p57, %p58
      %p61 = scmp.ne.s32.totalorder %s44, %s60
      %p62 = scmp.eq.s32.totalorder %s22, 0
      %p63 = por %p61, %p62
      %s64 = ssub.s32 %s24, %s31
      %p65 = scmp.eq.s32.totalorder %s64, 0
      %s67 = sadd.s32 %s66, 1
      %s68 = scalar_select %p65, %s66, %s67
      %p71 = pneg %p65
      %p72 = scmp.eq.s32.totalorder %s16, 1
      %p73 = por %p71, %p72
      %p74 = scmp.ne.s32.totalorder %s66, %s69
      %p75 = scmp.eq.s32.totalorder %s16, 0
      %p76 = por %p74, %p75
      %p77 = scmp.ne.s32.totalorder %s66, %s69
      %p78 = scmp.eq.s32.totalorder %s21, 1
      %p79 = por %p77, %p78
      %p80 = scmp.ne.s32.totalorder %s69, %s70
      %p81 = scmp.eq.s32.totalorder %s21, 0
      %p82 = por %p80, %p81
      %p83 = scmp.ne.s32.totalorder %s69, %s70
      %p84 = scmp.eq.s32.totalorder %s22, 1
      %p85 = por %p83, %p84
      %p87 = scmp.ne.s32.totalorder %s70, %s86
      %p88 = scmp.eq.s32.totalorder %s22, 0
      %p89 = por %p87, %p88
      %s91 = sadd.s32 %s90, 1
      %p94 = scmp.eq.s32.totalorder %s16, 1
      %p95 = scmp.ne.s32.totalorder %s90, %s92
      %p96 = scmp.eq.s32.totalorder %s16, 0
      %p97 = por %p95, %p96
      %p98 = scmp.ne.s32.totalorder %s90, %s92
      %p99 = scmp.eq.s32.totalorder %s21, 1
      %p100 = por %p98, %p99
      %p101 = scmp.ne.s32.totalorder %s92, %s93
      %p102 = scmp.eq.s32.totalorder %s21, 0
      %p103 = por %p101, %p102
      %p104 = scmp.ne.s32.totalorder %s92, %s93
      %p105 = scmp.eq.s32.totalorder %s22, 1
      %p106 = por %p104, %p105
      %p108 = scmp.ne.s32.totalorder %s93, %s107
      %p109 = scmp.eq.s32.totalorder %s22, 0
      %p110 = por %p108, %p109
      %s111 = ssub.s32 %s23, %s35
      %s112 = ssub.s32 %s24, %s31
      %s113 = sor.u32 %s111, %s112
      %p114 = scmp.eq.s32.totalorder %s113, 0
      %s116 = sadd.s32 %s115, 1
      %s117 = scalar_select %p114, %s115, %s116
      %p120 = pneg %p114
      %p121 = scmp.eq.s32.totalorder %s16, 1
      %p122 = por %p120, %p121
      %p123 = scmp.ne.s32.totalorder %s115, %s118
      %p124 = scmp.eq.s32.totalorder %s16, 0
      %p125 = por %p123, %p124
      %p126 = scmp.ne.s32.totalorder %s115, %s118
      %p127 = scmp.eq.s32.totalorder %s21, 1
      %p128 = por %p126, %p127
      %p129 = scmp.ne.s32.totalorder %s118, %s119
      %p130 = scmp.eq.s32.totalorder %s21, 0
      %p131 = por %p129, %p130
      %p132 = scmp.ne.s32.totalorder %s118, %s119
      %p133 = scmp.eq.s32.totalorder %s22, 1
      %p134 = por %p132, %p133
      %p136 = scmp.ne.s32.totalorder %s119, %s135
      %p137 = scmp.eq.s32.totalorder %s22, 0
      %p138 = por %p136, %p137
      %s139 = ssub.s32 %s23, %s35
      %s140 = ssub.s32 %s24, %s31
      %s141 = sor.u32 %s139, %s140
      %p142 = scmp.eq.s32.totalorder %s141, 0
      %s144 = sadd.s32 %s143, 1
      %s145 = scalar_select %p142, %s143, %s144
      %p148 = pneg %p142
      %p149 = scmp.eq.s32.totalorder %s16, 1
      %p150 = por %p148, %p149
      %p151 = scmp.ne.s32.totalorder %s143, %s146
      %p152 = scmp.eq.s32.totalorder %s16, 0
      %p153 = por %p151, %p152
      %p154 = scmp.ne.s32.totalorder %s143, %s146
      %p155 = scmp.eq.s32.totalorder %s21, 1
      %p156 = por %p154, %p155
      %p157 = scmp.ne.s32.totalorder %s146, %s147
      %p158 = scmp.eq.s32.totalorder %s21, 0
      %p159 = por %p157, %p158
      %p160 = scmp.ne.s32.totalorder %s146, %s147
      %p161 = scmp.eq.s32.totalorder %s22, 1
      %p162 = por %p160, %p161
      %p164 = scmp.ne.s32.totalorder %s147, %s163
      %p165 = scmp.eq.s32.totalorder %s22, 0
      %p166 = por %p164, %p165
      %s167 = ssub.s32 %s23, %s35
      %s168 = ssub.s32 %s24, %s31
      %s169 = sor.u32 %s167, %s168
      %p170 = scmp.eq.s32.totalorder %s169, 0
      %s172 = sadd.s32 %s171, 1
      %s173 = scalar_select %p170, %s171, %s172
      %p176 = pneg %p170
      %p177 = scmp.eq.s32.totalorder %s16, 1
      %p178 = por %p176, %p177
      %p179 = scmp.ne.s32.totalorder %s171, %s174
      %p180 = scmp.eq.s32.totalorder %s16, 0
      %p181 = por %p179, %p180
      %p182 = scmp.ne.s32.totalorder %s171, %s174
      %p183 = scmp.eq.s32.totalorder %s21, 1
      %p184 = por %p182, %p183
      %p185 = scmp.ne.s32.totalorder %s174, %s175
      %p186 = scmp.eq.s32.totalorder %s21, 0
      %p187 = por %p185, %p186
      %p188 = scmp.ne.s32.totalorder %s174, %s175
      %p189 = scmp.eq.s32.totalorder %s22, 1
      %p190 = por %p188, %p189
      %p192 = scmp.ne.s32.totalorder %s175, %s191
      %p193 = scmp.eq.s32.totalorder %s22, 0
      %p194 = por %p192, %p193
      %p195 = scmp.le.s32.totalorder 1, %s16
      %p196 = scmp.lt.s32.totalorder %s16, 3
      %p197 = pnand %p195, %p196
      %p198 = pneg %p197
      // Predicated region
      $region9: #{tpu_custom_call.1} parent=5 // pred_check
        _
      $region10: #{tpu_custom_call.1} parent=5 // pred_check_branch
        %200 = sbr.rel (%p197) target = $region12
      $region11: #{tpu_custom_call.1} parent=5 // pred_region
        %s201 = ssub.s32 %s16, 1
        // Predicated region
        $region13: #{tpu_custom_call.1} parent=11 // pred_check
          %p202 = pneg %p82
        $region14: #{tpu_custom_call.1} parent=11 // pred_check_branch
          %204 = sbr.rel (%p202) target = $region16
        $region15: #{tpu_custom_call.1} parent=11 // pred_region
          %206 = vsyncadd [#allocation5], 0
          %s207 = smul.addr %s26, 8
          %s208 = scalar_lea.hbm %s1, %s207
          %s210 = sshll.u32 %s208, 4
          %s211 = int_to_ptr.hbm [resolvable:$true] %s210
          %s212 = sshll.u32 [#allocation4], 4
          %s213 = int_to_ptr.vmem [resolvable:$true] %s212
          %215 = dma.hbm_to_vmem [thread:$0]  %s211, 128, %s213, [#allocation5]
        $region16: #{tpu_custom_call.1} parent=11 // pred_fallthru
          _
        // Predicated region
        $region17: #{tpu_custom_call.1} parent=11 // pred_check
          %p216 = pneg %p103
        $region18: #{tpu_custom_call.1} parent=11 // pred_check_branch
          %218 = sbr.rel (%p216) target = $region20
        $region19: #{tpu_custom_call.1} parent=11 // pred_region
          %220 = vsyncadd [#allocation5], 0
          %s222 = sshll.u32 %s2, 4
          %s223 = int_to_ptr.hbm [resolvable:$true] %s222
          %s224 = sshll.u32 [#allocation6], 4
          %s225 = int_to_ptr.vmem [resolvable:$true] %s224
          %227 = dma.hbm_to_vmem [thread:$0]  %s223, 64, %s225, [#allocation5]
        $region20: #{tpu_custom_call.1} parent=11 // pred_fallthru
          _
      $region12: #{tpu_custom_call.1} parent=5 // pred_fallthru
        _
      %p228 = scmp.lt.s32.totalorder %s16, 2
      // Predicated region
      $region21: #{tpu_custom_call.1} parent=5 // pred_check
        %p229 = pneg %p228
      $region22: #{tpu_custom_call.1} parent=5 // pred_check_branch
        %231 = sbr.rel (%p229) target = $region24
      $region23: #{tpu_custom_call.1} parent=5 // pred_region
        // Predicated region
        $region25: #{tpu_custom_call.1} parent=23 // pred_check
          %p232 = pneg %p50
        $region26: #{tpu_custom_call.1} parent=23 // pred_check_branch
          %234 = sbr.rel (%p232) target = $region28
        $region27: #{tpu_custom_call.1} parent=23 // pred_region
          %s235 = sand.u32 %s40, 1
          %s236 = scalar_lea.sflag [#allocation3], %s235
          %s237 = sand.u32 %s40, 1
          %s238 = smul.addr %s237, 8
          %s239 = scalar_lea.vmem [#allocation2], %s238
          %241 = vsyncadd %s236, 0
          %s242 = sadd.s32 %s24, %s23
          %s243 = smul.addr %s242, 8
          %s244 = scalar_lea.hbm %s0, %s243
          %s246 = sshll.u32 %s244, 4
          %s247 = int_to_ptr.hbm [resolvable:$true] %s246
          %s248 = sshll.u32 %s239, 4
          %s249 = int_to_ptr.vmem [resolvable:$true] %s248
          %251 = dma.hbm_to_vmem [thread:$0]  %s247, 128, %s249, %s236
        $region28: #{tpu_custom_call.1} parent=23 // pred_fallthru
          _
      $region24: #{tpu_custom_call.1} parent=5 // pred_fallthru
        _
      %p252 = scmp.le.s32.totalorder 1, %s16
      %p253 = scmp.lt.s32.totalorder %s16, 3
      %p254 = pnand %p252, %p253
      %p255 = pneg %p254
      // Predicated region
      $region29: #{tpu_custom_call.1} parent=5 // pred_check
        _
      $region30: #{tpu_custom_call.1} parent=5 // pred_check_branch
        %257 = sbr.rel (%p254) target = $region32
      $region31: #{tpu_custom_call.1} parent=5 // pred_region
        %s258 = ssub.s32 %s16, 1
        %s259 = sand.u32 %s43, 1
        %s260 = scalar_lea.sflag [#allocation3], %s259
        %s261 = sand.u32 %s43, 1
        %s262 = smul.addr %s261, 8
        %s263 = scalar_lea.vmem [#allocation2], %s262
        // Predicated region
        $region33: #{tpu_custom_call.1} parent=31 // pred_check
          %p264 = pneg %p56
        $region34: #{tpu_custom_call.1} parent=31 // pred_check_branch
          %266 = sbr.rel (%p264) target = $region36
        $region35: #{tpu_custom_call.1} parent=31 // pred_region
          %268 = dma.done %s260, 128
        $region36: #{tpu_custom_call.1} parent=31 // pred_fallthru
          _
        // Predicated region
        $region37: #{tpu_custom_call.1} parent=31 // pred_check
          %p269 = pneg %p82
        $region38: #{tpu_custom_call.1} parent=31 // pred_check_branch
          %271 = sbr.rel (%p269) target = $region40
        $region39: #{tpu_custom_call.1} parent=31 // pred_region
          %273 = dma.done [#allocation5], 128
        $region40: #{tpu_custom_call.1} parent=31 // pred_fallthru
          _
        // Predicated region
        $region41: #{tpu_custom_call.1} parent=31 // pred_check
          %p274 = pneg %p103
        $region42: #{tpu_custom_call.1} parent=31 // pred_check_branch
          %276 = sbr.rel (%p274) target = $region44
        $region43: #{tpu_custom_call.1} parent=31 // pred_region
          %278 = dma.done [#allocation5], 64
        $region44: #{tpu_custom_call.1} parent=31 // pred_fallthru
          _
        %s279 = sand.u32 %s43, 1
        %s280 = scalar_lea.sflag [#allocation3], %s279
        %s281 = sand.u32 %s43, 1
        %s282 = smul.addr %s281, 8
        %s283 = scalar_lea.vmem [#allocation2], %s282
        %p284 = pneg %p56
        %p285 = pneg %p53
        %p286 = pneg %p82
        %p287 = pneg %p79
        %p288 = pneg %p103
        %p289 = pneg %p100
        %p290 = pneg %p131
        %p291 = pneg %p128
        %p292 = scmp.lt.s32.totalorder %s25, 1
        %s293 = scalar_select %p292, %s25, 1
        %p294 = scmp.lt.s32.totalorder %s26, 0
        %s295 = scalar_select %p294, %s26, 0
        %s296 = smul.addr %s293, 2
        %s297 = sadd.s32 %s295, %s296
        %s298 = smul.addr %s297, 4
        %s299 = scalar_lea.vmem %s3, %s298
        %p300 = pneg %p159
        %p301 = pneg %p156
        %p302 = scmp.lt.s32.totalorder %s25, 1
        %s303 = scalar_select %p302, %s25, 1
        %p304 = scmp.lt.s32.totalorder %s26, 0
        %s305 = scalar_select %p304, %s26, 0
        %s306 = smul.addr %s303, 2
        %s307 = sadd.s32 %s305, %s306
        %s308 = smul.addr %s307, 4
        %s309 = scalar_lea.vmem %s4, %s308
        %p310 = pneg %p187
        %p311 = pneg %p184
        %p312 = scmp.lt.s32.totalorder %s25, 1
        %s313 = scalar_select %p312, %s25, 1
        %p314 = scmp.lt.s32.totalorder %s26, 0
        %s315 = scalar_select %p314, %s26, 0
        %s316 = smul.addr %s313, 2
        %s317 = sadd.s32 %s315, %s316
        %s318 = smul.addr %s317, 4
        %s319 = scalar_lea.vmem %s5, %s318
        %p320 = scmp.lt.s32.totalorder %s25, 1
        %s321 = scalar_select %p320, %s25, 1
        %p322 = scmp.lt.s32.totalorder %s26, 0
        %s323 = scalar_select %p322, %s26, 0
        %s324 = smul.addr %s321, 2
        %s325 = sadd.s32 %s323, %s324
        %s326 = smul.addr %s325, 4
        %s327 = scalar_lea.vmem %s3, %s326
        %p328 = scmp.lt.s32.totalorder %s25, 1
        %s329 = scalar_select %p328, %s25, 1
        %p330 = scmp.lt.s32.totalorder %s26, 0
        %s331 = scalar_select %p330, %s26, 0
        %s332 = smul.addr %s329, 2
        %s333 = sadd.s32 %s331, %s332
        %s334 = smul.addr %s333, 4
        %s335 = scalar_lea.vmem %s4, %s334
        %p336 = scmp.lt.s32.totalorder %s25, 1
        %s337 = scalar_select %p336, %s25, 1
        %p338 = scmp.lt.s32.totalorder %s26, 0
        %s339 = scalar_select %p338, %s26, 0
        %s340 = smul.addr %s337, 2
        %s341 = sadd.s32 %s339, %s340
        %s342 = smul.addr %s341, 4
        %s343 = scalar_lea.vmem %s5, %s342
        %v345 = vld [vmem:[%s263] sm:$0xff]
        %v346 = vld [vmem:[#allocation4] sm:$0xff]
        %v347 = vadd.f32 %v345, %v346
        %v348 = vpack.c.bf16 %v347, %v347
        %v349 = vld [vmem:[#allocation6] sm:$0xf]
        %vm350 = vcmask 64512
        %v352 = vsel %vm350, %v348, 0
        %vm354 = vcmask 1043456
        %v356 = vsel %vm354, %v349, 0
        %358 = vmatpush.bf16.msra.mxu0 0
        %359 = vmatpush.bf16.msra.mxu0 0
        %360 = vmatpush.bf16.msra.mxu0 0
        %361 = vmatpush.bf16.msra.mxu0 0
        %362 = vmatpush.bf16.msra.mxu0 0
        %363 = vmatpush.bf16.msra.mxu0 0
        %364 = vmatpush.bf16.msra.mxu0 0
        %365 = vmatpush.bf16.msra.mxu0 %v356
        %366 = vmatmul.bf16.gmra.mxu0 %v352
        %v367 = vpop.f32.mrf.mxu0
        %v368 = vadd.f32 0.0, %v367
        %v369 = vpop.f32.mrf.mxu0
        %370 = vdwg.mxu0
        %v371 = vmul.f32 %v368, 0.5
        %v372 = vpack.c.bf16 %v371, %v371
        %374 = vrot.lane.b32.xlu0 %v372, 124
        %v375 = vpop.permute.xlu0 %374
        %v378 = vpack.i.b16 %v375, %v372
        %v379 = vshrl.u32 %v372, 16
        %v380 = vshrl.u32 %v375, 16
        %v381 = vpack.i.b16 %v380, %v379
        %v384 = vunpack.c.l.s4 1983009808
        %v385 = vunpack.c.0.s8 %v384
        %v386 = vperm.slane %v378, %v385
        %v387 = vrot.slane %v386, 4
        %vm388 = vcmask 1047556
        %v389 = vsel %vm388, 0, %v387
        %v391 = vunpack.c.l.s4 1934713408
        %v392 = vunpack.c.0.s8 %v391
        %v393 = vperm.slane %v386, %v392
        %v395 = vunpack.c.l.s4 1934713408
        %v396 = vunpack.c.0.s8 %v395
        %v397 = vperm.slane %v389, %v396
        %v398 = vrot.slane %v393, 4
        %v399 = vsel %vm388, 0, %v398
        %v400 = vrot.slane %v397, 4
        %v401 = vsel %vm388, 0, %v400
        %v404 = vunpack.c.l.s4 1983009808
        %v405 = vunpack.c.0.s8 %v404
        %v406 = vperm.slane %v381, %v405
        %v407 = vrot.slane %v406, 4
        %v408 = vsel %vm388, 0, %v407
        %v410 = vunpack.c.l.s4 1934713408
        %v411 = vunpack.c.0.s8 %v410
        %v412 = vperm.slane %v406, %v411
        %v414 = vunpack.c.l.s4 1934713408
        %v415 = vunpack.c.0.s8 %v414
        %v416 = vperm.slane %v408, %v415
        %v417 = vrot.slane %v412, 4
        %v418 = vsel %vm388, 0, %v417
        %v419 = vrot.slane %v416, 4
        %v420 = vsel %vm388, 0, %v419
        %v421 = vsel %vm388, %v400, %v393
        %v423 = vunpack.c.l.s4 1983009808
        %v424 = vunpack.c.0.s8 %v423
        %v425 = vperm.slane %v421, %v424
        %v426 = vrot.slane %v401, 4
        %v427 = vsel %vm388, %v426, %v399
        %v429 = vunpack.c.l.s4 1983009808
        %v430 = vunpack.c.0.s8 %v429
        %v431 = vperm.slane %v427, %v430
        %v432 = vrot.slane %v431, 4
        %v433 = vsel %vm388, %v432, %v425
        %v435 = vunpack.c.l.s4 1934713408
        %v436 = vunpack.c.0.s8 %v435
        %v437 = vperm.slane %v433, %v436
        %v438 = vsel %vm388, %v419, %v412
        %v440 = vunpack.c.l.s4 1983009808
        %v441 = vunpack.c.0.s8 %v440
        %v442 = vperm.slane %v438, %v441
        %v443 = vrot.slane %v420, 4
        %v444 = vsel %vm388, %v443, %v418
        %v446 = vunpack.c.l.s4 1983009808
        %v447 = vunpack.c.0.s8 %v446
        %v448 = vperm.slane %v444, %v447
        %v449 = vrot.slane %v448, 4
        %v450 = vsel %vm388, %v449, %v442
        %v452 = vunpack.c.l.s4 1934713408
        %v453 = vunpack.c.0.s8 %v452
        %v454 = vperm.slane %v450, %v453
        %v457 = vpack.i.b16 %v454, %v437
        %v459 = vshrl.u32 %v437, 16
        %v460 = vshrl.u32 %v454, 16
        %v461 = vpack.i.b16 %v460, %v459
        %vm463 = vcmask 27648
        %464 = vst.msk [vmem:[%s327] sm:$0xf] %vm463, %v457
        %465 = vst.msk [vmem:[%s327 + $0x4] sm:$0xf] %vm463, %v461
        %v466 = vpack.c.bf16 %v368, %v368
        %468 = vrot.lane.b32.xlu0 %v466, 124
        %v469 = vpop.permute.xlu0 %468
        %470 = vrot.lane.b32.xlu0 %v466, 120
        %v471 = vpop.permute.xlu0 %470
        %472 = vrot.lane.b32.xlu0 %v469, 120
        %v473 = vpop.permute.xlu0 %472
        %v476 = vpack.i.b16 %v473, %v471
        %v477 = vshrl.u32 %v471, 16
        %v478 = vshrl.u32 %v473, 16
        %v479 = vpack.i.b16 %v478, %v477
        %v482 = vunpack.c.l.s4 1983009808
        %v483 = vunpack.c.0.s8 %v482
        %v484 = vperm.slane %v476, %v483
        %v485 = vrot.slane %v484, 4
        %v486 = vsel %vm388, 0, %v485
        %v488 = vunpack.c.l.s4 1934713408
        %v489 = vunpack.c.0.s8 %v488
        %v490 = vperm.slane %v484, %v489
        %v492 = vunpack.c.l.s4 1934713408
        %v493 = vunpack.c.0.s8 %v492
        %v494 = vperm.slane %v486, %v493
        %v495 = vrot.slane %v490, 4
        %v496 = vsel %vm388, 0, %v495
        %v497 = vrot.slane %v494, 4
        %v498 = vsel %vm388, 0, %v497
        %v501 = vunpack.c.l.s4 1983009808
        %v502 = vunpack.c.0.s8 %v501
        %v503 = vperm.slane %v479, %v502
        %v504 = vrot.slane %v503, 4
        %v505 = vsel %vm388, 0, %v504
        %v507 = vunpack.c.l.s4 1934713408
        %v508 = vunpack.c.0.s8 %v507
        %v509 = vperm.slane %v503, %v508
        %v511 = vunpack.c.l.s4 1934713408
        %v512 = vunpack.c.0.s8 %v511
        %v513 = vperm.slane %v505, %v512
        %v514 = vrot.slane %v509, 4
        %v515 = vsel %vm388, 0, %v514
        %v516 = vrot.slane %v513, 4
        %v517 = vsel %vm388, 0, %v516
        %v518 = vsel %vm388, %v497, %v490
        %v520 = vunpack.c.l.s4 1983009808
        %v521 = vunpack.c.0.s8 %v520
        %v522 = vperm.slane %v518, %v521
        %v523 = vrot.slane %v498, 4
        %v524 = vsel %vm388, %v523, %v496
        %v526 = vunpack.c.l.s4 1983009808
        %v527 = vunpack.c.0.s8 %v526
        %v528 = vperm.slane %v524, %v527
        %v529 = vrot.slane %v528, 4
        %v530 = vsel %vm388, %v529, %v522
        %v532 = vunpack.c.l.s4 1934713408
        %v533 = vunpack.c.0.s8 %v532
        %v534 = vperm.slane %v530, %v533
        %v535 = vsel %vm388, %v516, %v509
        %v537 = vunpack.c.l.s4 1983009808
        %v538 = vunpack.c.0.s8 %v537
        %v539 = vperm.slane %v535, %v538
        %v540 = vrot.slane %v517, 4
        %v541 = vsel %vm388, %v540, %v515
        %v543 = vunpack.c.l.s4 1983009808
        %v544 = vunpack.c.0.s8 %v543
        %v545 = vperm.slane %v541, %v544
        %v546 = vrot.slane %v545, 4
        %v547 = vsel %vm388, %v546, %v539
        %v549 = vunpack.c.l.s4 1934713408
        %v550 = vunpack.c.0.s8 %v549
        %v551 = vperm.slane %v547, %v550
        %v554 = vpack.i.b16 %v551, %v534
        %v556 = vshrl.u32 %v534, 16
        %v557 = vshrl.u32 %v551, 16
        %v558 = vpack.i.b16 %v557, %v556
        %560 = vst.msk [vmem:[%s335] sm:$0xf] %vm463, %v554
        %561 = vst.msk [vmem:[%s335 + $0x4] sm:$0xf] %vm463, %v558
        %562 = vrot.lane.b32.xlu0 %v466, 112
        %v563 = vpop.permute.xlu0 %562
        %564 = vrot.lane.b32.xlu0 %v469, 112
        %v565 = vpop.permute.xlu0 %564
        %v568 = vpack.i.b16 %v565, %v563
        %v569 = vshrl.u32 %v563, 16
        %v570 = vshrl.u32 %v565, 16
        %v571 = vpack.i.b16 %v570, %v569
        %v574 = vunpack.c.l.s4 1983009808
        %v575 = vunpack.c.0.s8 %v574
        %v576 = vperm.slane %v568, %v575
        %v577 = vrot.slane %v576, 4
        %v578 = vsel %vm388, 0, %v577
        %v580 = vunpack.c.l.s4 1934713408
        %v581 = vunpack.c.0.s8 %v580
        %v582 = vperm.slane %v576, %v581
        %v584 = vunpack.c.l.s4 1934713408
        %v585 = vunpack.c.0.s8 %v584
        %v586 = vperm.slane %v578, %v585
        %v587 = vrot.slane %v582, 4
        %v588 = vsel %vm388, 0, %v587
        %v589 = vrot.slane %v586, 4
        %v590 = vsel %vm388, 0, %v589
        %v593 = vunpack.c.l.s4 1983009808
        %v594 = vunpack.c.0.s8 %v593
        %v595 = vperm.slane %v571, %v594
        %v596 = vrot.slane %v595, 4
        %v597 = vsel %vm388, 0, %v596
        %v599 = vunpack.c.l.s4 1934713408
        %v600 = vunpack.c.0.s8 %v599
        %v601 = vperm.slane %v595, %v600
        %v603 = vunpack.c.l.s4 1934713408
        %v604 = vunpack.c.0.s8 %v603
        %v605 = vperm.slane %v597, %v604
        %v606 = vrot.slane %v601, 4
        %v607 = vsel %vm388, 0, %v606
        %v608 = vrot.slane %v605, 4
        %v609 = vsel %vm388, 0, %v608
        %v610 = vsel %vm388, %v589, %v582
        %v612 = vunpack.c.l.s4 1983009808
        %v613 = vunpack.c.0.s8 %v612
        %v614 = vperm.slane %v610, %v613
        %v615 = vrot.slane %v590, 4
        %v616 = vsel %vm388, %v615, %v588
        %v618 = vunpack.c.l.s4 1983009808
        %v619 = vunpack.c.0.s8 %v618
        %v620 = vperm.slane %v616, %v619
        %v621 = vrot.slane %v620, 4
        %v622 = vsel %vm388, %v621, %v614
        %v624 = vunpack.c.l.s4 1934713408
        %v625 = vunpack.c.0.s8 %v624
        %v626 = vperm.slane %v622, %v625
        %v627 = vsel %vm388, %v608, %v601
        %v629 = vunpack.c.l.s4 1983009808
        %v630 = vunpack.c.0.s8 %v629
        %v631 = vperm.slane %v627, %v630
        %v632 = vrot.slane %v609, 4
        %v633 = vsel %vm388, %v632, %v607
        %v635 = vunpack.c.l.s4 1983009808
        %v636 = vunpack.c.0.s8 %v635
        %v637 = vperm.slane %v633, %v636
        %v638 = vrot.slane %v637, 4
        %v639 = vsel %vm388, %v638, %v631
        %v641 = vunpack.c.l.s4 1934713408
        %v642 = vunpack.c.0.s8 %v641
        %v643 = vperm.slane %v639, %v642
        %v646 = vpack.i.b16 %v643, %v626
        %v648 = vshrl.u32 %v626, 16
        %v649 = vshrl.u32 %v643, 16
        %v650 = vpack.i.b16 %v649, %v648
        %652 = vst.msk [vmem:[%s343] sm:$0xf] %vm463, %v646
        %653 = vst.msk [vmem:[%s343 + $0x4] sm:$0xf] %vm463, %v650
        %p654 = scmp.lt.s32.totalorder %s25, 1
        %s655 = scalar_select %p654, %s25, 1
        %p656 = scmp.lt.s32.totalorder %s26, 0
        %s657 = scalar_select %p656, %s26, 0
        %s658 = smul.addr %s655, 2
        %s659 = sadd.s32 %s657, %s658
        %s660 = smul.addr %s659, 4
        %s661 = scalar_lea.vmem %s3, %s660
        %p662 = scmp.lt.s32.totalorder %s25, 1
        %s663 = scalar_select %p662, %s25, 1
        %p664 = scmp.lt.s32.totalorder %s26, 0
        %s665 = scalar_select %p664, %s26, 0
        %s666 = smul.addr %s663, 2
        %s667 = sadd.s32 %s665, %s666
        %s668 = smul.addr %s667, 4
        %s669 = scalar_lea.vmem %s4, %s668
        %p670 = scmp.lt.s32.totalorder %s25, 1
        %s671 = scalar_select %p670, %s25, 1
        %p672 = scmp.lt.s32.totalorder %s26, 0
        %s673 = scalar_select %p672, %s26, 0
        %s674 = smul.addr %s671, 2
        %s675 = sadd.s32 %s673, %s674
        %s676 = smul.addr %s675, 4
        %s677 = scalar_lea.vmem %s5, %s676
        // Predicated region
        $region45: #{tpu_custom_call.1} parent=31 // pred_check
          %p678 = pneg %p128
        $region46: #{tpu_custom_call.1} parent=31 // pred_check_branch
          %680 = sbr.rel (%p678) target = $region48
        $region47: #{tpu_custom_call.1} parent=31 // pred_region
          _
        $region48: #{tpu_custom_call.1} parent=31 // pred_fallthru
          _
        // Predicated region
        $region49: #{tpu_custom_call.1} parent=31 // pred_check
          %p681 = pneg %p156
        $region50: #{tpu_custom_call.1} parent=31 // pred_check_branch
          %683 = sbr.rel (%p681) target = $region52
        $region51: #{tpu_custom_call.1} parent=31 // pred_region
          _
        $region52: #{tpu_custom_call.1} parent=31 // pred_fallthru
          _
        // Predicated region
        $region53: #{tpu_custom_call.1} parent=31 // pred_check
          %p684 = pneg %p184
        $region54: #{tpu_custom_call.1} parent=31 // pred_check_branch
          %686 = sbr.rel (%p684) target = $region56
        $region55: #{tpu_custom_call.1} parent=31 // pred_region
          _
        $region56: #{tpu_custom_call.1} parent=31 // pred_fallthru
          _
      $region32: #{tpu_custom_call.1} parent=5 // pred_fallthru
        _
      %p687 = scmp.le.s32.totalorder 2, %s16
      // Predicated region
      $region57: #{tpu_custom_call.1} parent=5 // pred_check
        %p688 = pneg %p687
      $region58: #{tpu_custom_call.1} parent=5 // pred_check_branch
        %690 = sbr.rel (%p688) target = $region60
      $region59: #{tpu_custom_call.1} parent=5 // pred_region
        %s691 = ssub.s32 %s16, 2
        // Predicated region
        $region61: #{tpu_custom_call.1} parent=59 // pred_check
          %p692 = pneg %p134
        $region62: #{tpu_custom_call.1} parent=59 // pred_check_branch
          %694 = sbr.rel (%p692) target = $region64
        $region63: #{tpu_custom_call.1} parent=59 // pred_region
          %p695 = scmp.lt.s32.totalorder %s27, 1
          %s696 = scalar_select %p695, %s27, 1
          %p697 = scmp.lt.s32.totalorder %s28, 0
          %s698 = scalar_select %p697, %s28, 0
          %s699 = smul.addr %s696, 2
          %s700 = sadd.s32 %s698, %s699
          %s701 = smul.addr %s700, 4
          %s702 = scalar_lea.vmem %s3, %s701
        $region64: #{tpu_custom_call.1} parent=59 // pred_fallthru
          _
        // Predicated region
        $region65: #{tpu_custom_call.1} parent=59 // pred_check
          %p703 = pneg %p162
        $region66: #{tpu_custom_call.1} parent=59 // pred_check_branch
          %705 = sbr.rel (%p703) target = $region68
        $region67: #{tpu_custom_call.1} parent=59 // pred_region
          %p706 = scmp.lt.s32.totalorder %s27, 1
          %s707 = scalar_select %p706, %s27, 1
          %p708 = scmp.lt.s32.totalorder %s28, 0
          %s709 = scalar_select %p708, %s28, 0
          %s710 = smul.addr %s707, 2
          %s711 = sadd.s32 %s709, %s710
          %s712 = smul.addr %s711, 4
          %s713 = scalar_lea.vmem %s4, %s712
        $region68: #{tpu_custom_call.1} parent=59 // pred_fallthru
          _
        // Predicated region
        $region69: #{tpu_custom_call.1} parent=59 // pred_check
          %p714 = pneg %p190
        $region70: #{tpu_custom_call.1} parent=59 // pred_check_branch
          %716 = sbr.rel (%p714) target = $region72
        $region71: #{tpu_custom_call.1} parent=59 // pred_region
          %p717 = scmp.lt.s32.totalorder %s27, 1
          %s718 = scalar_select %p717, %s27, 1
          %p719 = scmp.lt.s32.totalorder %s28, 0
          %s720 = scalar_select %p719, %s28, 0
          %s721 = smul.addr %s718, 2
          %s722 = sadd.s32 %s720, %s721
          %s723 = smul.addr %s722, 4
          %s724 = scalar_lea.vmem %s5, %s723
        $region72: #{tpu_custom_call.1} parent=59 // pred_fallthru
          _
      $region60: #{tpu_custom_call.1} parent=5 // pred_fallthru
        _
    $region6: #{tpu_custom_call.1} parent=1 // loop_footer
      %s20 = sadd.s32 1, %s16
    $region7: #{tpu_custom_call.1} parent=1 // loop_footer_branch
      %15 = sbr.rel target = $region3
    $region8: #{tpu_custom_call.1} parent=1 // loop_exit
      _
    %725 = vsyncpa [#allocation3], 1
    %s726 = scalar_lea.sflag [#allocation3], 1
    %727 = vsyncpa %s726, 1
    %728 = vsyncpa [#allocation5], 1

</llo_original>
